<compile_context>
chip_gen: v5e
topology: v5e:2x2
jax: 0.10.0
libtpu: 0.0.40
codegen_flags: <defaults>
</compile_context>

<pallas_src>
import functools

import jax
import jax.numpy as jnp
from jax.experimental import pallas as pl
from jax.experimental.pallas import tpu as pltpu

LANE = 128                      # channel padding (lane width)
MAX_TILE = 512                  # max row / contraction tile
VMEM_LIMIT = 48 * 1024 * 1024   # fits v7x 64 MiB physical with headroom


# ------------------------------------------------------------------ helpers
def _round_up(x, m):
    return ((x + m - 1) // m) * m


def _pad2(x, rows, cols):
    out = jnp.zeros((rows, cols), x.dtype)
    return out.at[: x.shape[0], : x.shape[1]].set(x)


def _choose_tiles(n):
    """Return (NP, TM, TK): node-row padding and tile sizes."""
    np_ = _round_up(max(n, 1), LANE)
    if np_ <= MAX_TILE:
        return np_, np_, np_          # single full-K tile
    np_ = _round_up(n, MAX_TILE)
    return np_, MAX_TILE, MAX_TILE


# ------------------------------------------------------------------ kernels
def _xw_kernel(src_idx_ref, x_ref, w_ref, o_ref):
    # per-relation X @ W (bf16 operands, f32 accumulate, bf16 lane-dense out)
    del src_idx_ref
    o_ref[...] = jnp.dot(
        x_ref[...], w_ref[...], preferred_element_type=jnp.float32
    ).astype(jnp.bfloat16)


def _attention_epilogue(hnew, watt_ref, batt_ref, qatt_ref, z_ref, score_ref,
                        i, n_valid, tm):
    # write the (bf16) per-relation hidden state and the HAN attention partial
    z_ref[...] = hnew.astype(jnp.bfloat16)
    proj = jnp.tanh(
        jnp.dot(hnew.astype(jnp.bfloat16), watt_ref[...],
                preferred_element_type=jnp.float32) + batt_ref[...])
    rows = jax.lax.broadcasted_iota(jnp.int32, (tm, 1), 0) + i * tm
    valid = (rows < n_valid).astype(jnp.float32)          # mask padded rows
    score_ref[...] = jnp.sum(proj * qatt_ref[...] * valid, axis=0, keepdims=True)


def _layer_kernel_gru(a_ref, xw_ref, b_ref, past_ref,
                      wi_ref, wh_ref, bi_ref, bh_ref,
                      watt_ref, batt_ref, qatt_ref,
                      z_ref, score_ref, acc_ref, *, n_valid, tm, cp):
    """Fused: conv accumulation (A @ XW), GRU update, attention score partial.

    grid = (relation, dst_tile i, src_tile k); k innermost & arbitrary.
    """
    i = pl.program_id(1)
    k = pl.program_id(2)

    @pl.when(k == 0)
    def _():
        acc_ref[...] = jnp.zeros_like(acc_ref)

    acc_ref[...] += jnp.dot(a_ref[...], xw_ref[...],
                            preferred_element_type=jnp.float32)

    @pl.when(k == pl.num_programs(2) - 1)
    def _():
        conv = acc_ref[...] + b_ref[...]                    # [tm, cp] f32
        xb = conv.astype(jnp.bfloat16)
        hb = past_ref[...]                                  # bf16 [tm, cp]
        # packed gate matmuls: [tm,cp]@[cp,3cp] (gates in r,z,n order)
        gi = jnp.dot(xb, wi_ref[...], preferred_element_type=jnp.float32) + bi_ref[...]
        gh = jnp.dot(hb, wh_ref[...], preferred_element_type=jnp.float32) + bh_ref[...]
        r_g = jax.nn.sigmoid(gi[:, 0 * cp:1 * cp] + gh[:, 0 * cp:1 * cp])
        z_g = jax.nn.sigmoid(gi[:, 1 * cp:2 * cp] + gh[:, 1 * cp:2 * cp])
        n_g = jnp.tanh(gi[:, 2 * cp:3 * cp] + r_g * gh[:, 2 * cp:3 * cp])
        hnew = (1.0 - z_g) * n_g + z_g * hb.astype(jnp.float32)   # torch GRUCell
        _attention_epilogue(hnew, watt_ref, batt_ref, qatt_ref,
                            z_ref, score_ref, i, n_valid, tm)


def _layer_kernel_nogru(a_ref, xw_ref, b_ref,
                        watt_ref, batt_ref, qatt_ref,
                        z_ref, score_ref, acc_ref, *, n_valid, tm, cp):
    """snap==0 variant: no past state / GRU weights streamed at all."""
    del cp
    i = pl.program_id(1)
    k = pl.program_id(2)

    @pl.when(k == 0)
    def _():
        acc_ref[...] = jnp.zeros_like(acc_ref)

    acc_ref[...] += jnp.dot(a_ref[...], xw_ref[...],
                            preferred_element_type=jnp.float32)

    @pl.when(k == pl.num_programs(2) - 1)
    def _():
        hnew = acc_ref[...] + b_ref[...]
        _attention_epilogue(hnew, watt_ref, batt_ref, qatt_ref,
                            z_ref, score_ref, i, n_valid, tm)


# ------------------------------------------------------------ pallas wrappers
def xw_call(src_idx, x_stack, w_stack, *, tm):
    """x_stack: [S, NP, CIN] bf16 (one per unique src type), w_stack: [R, CIN, CP] bf16.
    src_idx: [R] int32 mapping relation -> src-type slot.  Returns [R, NP, CP] bf16."""
    S, NP, CIN = x_stack.shape
    R, _, CP = w_stack.shape
    nt = NP // tm
    grid_spec = pltpu.PrefetchScalarGridSpec(
        num_scalar_prefetch=1,
        grid=(R, nt),
        in_specs=[
            pl.BlockSpec((None, tm, CIN), lambda r, i, sidx: (sidx[r], i, 0)),
            pl.BlockSpec((None, CIN, CP), lambda r, i, sidx: (r, 0, 0)),
        ],
        out_specs=pl.BlockSpec((None, tm, CP), lambda r, i, sidx: (r, i, 0)),
    )
    return pl.pallas_call(
        _xw_kernel,
        grid_spec=grid_spec,
        out_shape=jax.ShapeDtypeStruct((R, NP, CP), jnp.bfloat16),
        compiler_params=pltpu.CompilerParams(
            dimension_semantics=("parallel", "parallel"),
            vmem_limit_bytes=VMEM_LIMIT),
    )(src_idx, x_stack, w_stack)


def layer_call(a_stack, xw_stack, b_stack, att_p, *, gru_p, past,
               n_valid, tm, tk):
    """One fused Durendal layer for all relations into one destination node type."""
    R, NP, _ = a_stack.shape
    CP = xw_stack.shape[2]
    nt = NP // tm
    kt = NP // tk

    in_specs = [
        pl.BlockSpec((None, tm, tk), lambda r, i, k: (r, i, k)),     # A
        pl.BlockSpec((None, tk, CP), lambda r, i, k: (r, k, 0)),     # X @ W
        pl.BlockSpec((None, 1, CP), lambda r, i, k: (r, 0, 0)),      # conv bias
    ]
    args = [a_stack, xw_stack, b_stack]

    if gru_p is not None:
        in_specs += [
            pl.BlockSpec((None, tm, CP), lambda r, i, k: (r, i, 0)),   # past h (bf16)
            pl.BlockSpec((CP, 3 * CP), lambda r, i, k: (0, 0)),        # GRU W_i packed
            pl.BlockSpec((CP, 3 * CP), lambda r, i, k: (0, 0)),        # GRU W_h packed
            pl.BlockSpec((1, 3 * CP), lambda r, i, k: (0, 0)),         # GRU b_i packed
            pl.BlockSpec((1, 3 * CP), lambda r, i, k: (0, 0)),         # GRU b_h packed
        ]
        args += [past, gru_p["wi"], gru_p["wh"], gru_p["bi"], gru_p["bh"]]
        kernel = functools.partial(_layer_kernel_gru, n_valid=n_valid, tm=tm, cp=CP)
    else:
        kernel = functools.partial(_layer_kernel_nogru, n_valid=n_valid, tm=tm, cp=CP)

    in_specs += [
        pl.BlockSpec((CP, CP), lambda r, i, k: (0, 0)),              # attn W
        pl.BlockSpec((1, CP), lambda r, i, k: (0, 0)),               # attn b
        pl.BlockSpec((1, CP), lambda r, i, k: (0, 0)),               # attn q
    ]
    args += [att_p["w"], att_p["b"], att_p["q"]]

    z, score = pl.pallas_call(
        kernel,
        grid=(R, nt, kt),
        in_specs=in_specs,
        out_specs=[
            pl.BlockSpec((None, tm, CP), lambda r, i, k: (r, i, 0)),              # hidden z (bf16)
            pl.BlockSpec((None, 1, CP), lambda r, i, k, _nt=nt: (r * _nt + i, 0, 0)),  # score partials
        ],
        out_shape=[
            jax.ShapeDtypeStruct((R, NP, CP), jnp.bfloat16),
            jax.ShapeDtypeStruct((R * nt, 1, CP), jnp.float32),
        ],
        scratch_shapes=[pltpu.VMEM((tm, CP), jnp.float32)],
        compiler_params=pltpu.CompilerParams(
            dimension_semantics=("parallel", "parallel", "arbitrary"),
            vmem_limit_bytes=VMEM_LIMIT),
    )(*args)
    return z, score


# --------------------------------------------------------------- glue (JAX)
def mean_adj(edge_index, n_dst, n_src):
    src = edge_index[0]
    dst = edge_index[1]
    a = jnp.zeros((n_dst, n_src), jnp.float32).at[dst, src].add(1.0)
    deg = jnp.maximum(a.sum(axis=1, keepdims=True), 1.0)
    return a / deg


def init_params(key, in_ch, h1, h2, edge_types):
    ks = iter(jax.random.split(key, 64))

    def dense(k, fan_in, fan_out):
        scale = 1.0 / jnp.sqrt(jnp.float32(fan_in))
        return jax.random.uniform(k, (fan_in, fan_out), jnp.float32, -scale, scale)

    def gru(c):
        p = {g: dense(next(ks), c, c)
             for g in ("w_ir", "w_iz", "w_in", "w_hr", "w_hz", "w_hn")}
        for g in ("b_ir", "b_iz", "b_in", "b_hr", "b_hz", "b_hn"):
            p[g] = jnp.zeros((c,), jnp.float32)
        return p

    p = {}
    p["conv1"] = {et: {"w": dense(next(ks), in_ch, h1),
                       "b": jnp.zeros((h1,), jnp.float32)} for et in edge_types}
    p["update1"] = gru(h1)
    p["agg1"] = {"w": dense(next(ks), h1, h1), "b": jnp.zeros((h1,), jnp.float32),
                 "q": dense(next(ks), 1, h1).reshape(h1)}
    p["conv2"] = {et: {"w": dense(next(ks), h1, h2),
                       "b": jnp.zeros((h2,), jnp.float32)} for et in edge_types}
    p["update2"] = gru(h2)
    p["agg2"] = {"w": dense(next(ks), h2, h2), "b": jnp.zeros((h2,), jnp.float32),
                 "q": dense(next(ks), 1, h2).reshape(h2)}
    p["post"] = {"w": dense(next(ks), h2, 2), "b": jnp.zeros((2,), jnp.float32)}
    p["rel_emb"] = jax.random.normal(next(ks), (len(edge_types), 2), jnp.float32)
    return p


def pad_params(p, edge_types, in_ch, h1, h2):
    INP = _round_up(in_ch, 16)          # bf16 sublane multiple only (not 128)
    CP1 = _round_up(h1, LANE)
    CP2 = _round_up(h2, LANE)

    def pw(w, r, c):                    # weights -> bf16 (MXU inputs)
        return _pad2(w, r, c).astype(jnp.bfloat16)

    def pb(b, c):                       # biases/vectors stay f32
        return _pad2(b.reshape(1, -1), 1, c)

    def pgru(g, cp):
        # gate-packed [cp, 3*cp] (r, z, n order); biases [1, 3*cp]
        wi = jnp.concatenate([pw(g["w_ir"], cp, cp), pw(g["w_iz"], cp, cp),
                              pw(g["w_in"], cp, cp)], axis=1)
        wh = jnp.concatenate([pw(g["w_hr"], cp, cp), pw(g["w_hz"], cp, cp),
                              pw(g["w_hn"], cp, cp)], axis=1)
        bi = jnp.concatenate([pb(g["b_ir"], cp), pb(g["b_iz"], cp),
                              pb(g["b_in"], cp)], axis=1)
        bh = jnp.concatenate([pb(g["b_hr"], cp), pb(g["b_hz"], cp),
                              pb(g["b_hn"], cp)], axis=1)
        return {"wi": wi, "wh": wh, "bi": bi, "bh": bh}

    padded = {"INP": INP, "CP1": CP1, "CP2": CP2, "H1": h1, "H2": h2}
    padded["conv1"] = {et: {"w": pw(p["conv1"][et]["w"], INP, CP1),
                            "b": pb(p["conv1"][et]["b"], CP1)} for et in edge_types}
    padded["conv2"] = {et: {"w": pw(p["conv2"][et]["w"], CP1, CP2),
                            "b": pb(p["conv2"][et]["b"], CP2)} for et in edge_types}
    padded["gru1"] = pgru(p["update1"], CP1)
    padded["gru2"] = pgru(p["update2"], CP2)
    padded["att1"] = {"w": pw(p["agg1"]["w"], CP1, CP1),
                      "b": pb(p["agg1"]["b"], CP1), "q": pb(p["agg1"]["q"], CP1)}
    padded["att2"] = {"w": pw(p["agg2"]["w"], CP2, CP2),
                      "b": pb(p["agg2"]["b"], CP2), "q": pb(p["agg2"]["q"], CP2)}
    return padded


def _run_layer(ets, a_et, x_src, conv_pad, gru_pad, att_pad, past_dict,
               NP, CP, use_gru, n_valid, tm, tk):
    """One Durendal layer for all relations into one destination node type."""
    R = len(ets)
    a_stack = jnp.stack([a_et[et] for et in ets], 0)

    # one X slab per UNIQUE source node type (no R-fold duplication)
    src_types = []
    for et in ets:
        if et[0] not in src_types:
            src_types.append(et[0])
    src_idx = jnp.array([src_types.index(et[0]) for et in ets], jnp.int32)
    x_stack = jnp.stack([x_src[st].astype(jnp.bfloat16) for st in src_types], 0)

    w_stack = jnp.stack([conv_pad[et]["w"] for et in ets], 0)
    b_stack = jnp.stack([conv_pad[et]["b"] for et in ets], 0)
    xw = xw_call(src_idx, x_stack, w_stack, tm=tm)

    if use_gru:
        def get_past(et):
            if past_dict is not None and et in past_dict:
                return past_dict[et].astype(jnp.bfloat16)
            return jnp.zeros((1, 1), jnp.bfloat16)
        past = jnp.stack([_pad2(get_past(et), NP, CP) for et in ets], 0)
        z, score = layer_call(a_stack, xw, b_stack, att_pad,
                              gru_p=gru_pad, past=past,
                              n_valid=n_valid, tm=tm, tk=tk)
    else:
        z, score = layer_call(a_stack, xw, b_stack, att_pad,
                              gru_p=None, past=None,
                              n_valid=n_valid, tm=tm, tk=tk)

    # semantic attention softmax over relations (R is tiny -> plain JAX)
    nt = NP // tm
    s = score.reshape(R, nt, CP).sum(axis=(1, 2)) / float(n_valid)
    alpha = jax.nn.softmax(s)
    h_comb = jnp.einsum("r,rnc->nc", alpha, z.astype(jnp.float32))  # [NP, CP] f32
    return z, h_comb


def rdurendal_forward(params, padded, metadata, x_dict, edge_index_dict,
                      edge_label_index_dict, num_nodes_dict, snap,
                      NP, TM, TK, past1=None, past2=None):
    node_types, edge_types = metadata
    rel_to_index = {et: i for i, et in enumerate(edge_types)}
    INP, CP1, CP2 = padded["INP"], padded["CP1"], padded["CP2"]
    H1, H2 = padded["H1"], padded["H2"]

    # dense normalized adjacency: computed ONCE per edge type, reused by both layers
    a_et = {}
    for et in edge_types:
        src, _, dst = et
        a = mean_adj(edge_index_dict[et], num_nodes_dict[dst], num_nodes_dict[src])
        a_et[et] = _pad2(a, NP, NP).astype(jnp.bfloat16)

    ets_by_dst = {nt: [et for et in edge_types if et[2] == nt] for nt in node_types}
    x_pad = {nt: _pad2(x_dict[nt].astype(jnp.float32), NP, INP) for nt in node_types}

    # ---------------- layer 1: conv1 -> update1 (GRU) -> agg1 (attention) ----
    cur1, h1c = {}, {}
    for nt in node_types:
        ets = ets_by_dst[nt]
        if not ets:
            cur1[nt] = {}
            h1c[nt] = jnp.zeros((NP, CP1), jnp.float32)
            continue
        use_gru = (snap != 0) and (past1 is not None)
        past_nt = past1.get(nt) if use_gru else None
        z, h_comb = _run_layer(ets, a_et, x_pad, padded["conv1"],
                               padded["gru1"], padded["att1"], past_nt,
                               NP, CP1, use_gru=use_gru,
                               n_valid=num_nodes_dict[nt], tm=TM, tk=TK)
        cur1[nt] = {et: z[r, :num_nodes_dict[nt], :H1] for r, et in enumerate(ets)}
        h1c[nt] = h_comb

    # ---------------- layer 2: conv2 -> update2 (GRU) -> agg2 (attention) ----
    cur2, h2c = {}, {}
    for nt in node_types:
        ets = ets_by_dst[nt]
        if not ets:
            cur2[nt] = {}
            h2c[nt] = jnp.zeros((NP, CP2), jnp.float32)
            continue
        use_gru = (snap != 0) and (past2 is not None)
        past_nt = past2.get(nt) if use_gru else None
        z, h_comb = _run_layer(ets, a_et, h1c, padded["conv2"],
                               padded["gru2"], padded["att2"], past_nt,
                               NP, CP2, use_gru=use_gru,
                               n_valid=num_nodes_dict[nt], tm=TM, tk=TK)
        cur2[nt] = {et: z[r, :num_nodes_dict[nt], :H2] for r, et in enumerate(ets)}
        h2c[nt] = h_comb

    # ---------------- post Linear(h2 -> 2) + ComplEx-style scoring (plain JAX:
    # lane-sparse 2-wide / 1-wide outputs; a Pallas kernel only adds overhead) --
    post_out = {nt: h2c[nt][:num_nodes_dict[nt], :H2] @ params["post"]["w"]
                    + params["post"]["b"] for nt in node_types}
    h_dict = {}
    for et in edge_types:
        src, _, dst = et
        eli = edge_label_index_dict[et]
        head = jnp.take(post_out[src], eli[0], axis=0)
        tail = jnp.take(post_out[dst], eli[1], axis=0)
        rel = params["rel_emb"][rel_to_index[et]]
        hr, hi = head[:, 0], head[:, 1]
        tr, ti = tail[:, 0], tail[:, 1]
        rr, ri = rel[0], rel[1]
        h_dict[et] = hr * rr * tr + hi * rr * ti + hr * ri * ti - hi * ri * tr
    return h_dict, cur1, cur2


# -------------------------------------------------------------------- main
if __name__ == "__main__":
    key = jax.random.PRNGKey(0)
    node_types = ("n",)
    edge_types = (("n", "r0", "n"), ("n", "r1", "n"))
    metadata = (node_types, edge_types)

    N, IN_CH, H1, H2 = 16, 8, 32, 16
    E_GRAPH, E_LABEL = 24, 8

    keys = jax.random.split(key, 16)
    x_dict = {"n": jax.random.normal(keys[0], (N, IN_CH), jnp.float32)}
    num_nodes_dict = {"n": N}

    edge_index_dict = {}
    edge_label_index_dict = {}
    for i, et in enumerate(edge_types):
        edge_index_dict[et] = jax.random.randint(keys[1 + i], (2, E_GRAPH), 0, N)
        edge_label_index_dict[et] = jax.random.randint(keys[4 + i], (2, E_LABEL), 0, N)

    params = init_params(keys[8], IN_CH, H1, H2, edge_types)
    NP, TM, TK = _choose_tiles(max(num_nodes_dict.values()))
    padded = pad_params(params, edge_types, IN_CH, H1, H2)

    # snapshot 0 (no GRU update), then snapshot 1 reusing the produced state
    h0, cur1, cur2 = rdurendal_forward(params, padded, metadata, x_dict,
                                       edge_index_dict, edge_label_index_dict,
                                       num_nodes_dict, snap=0,
                                       NP=NP, TM=TM, TK=TK)
    h1o, cur1b, cur2b = rdurendal_forward(params, padded, metadata, x_dict,
                                          edge_index_dict, edge_label_index_dict,
                                          num_nodes_dict, snap=1,
                                          NP=NP, TM=TM, TK=TK,
                                          past1=cur1, past2=cur2)

    for et in edge_types:
        jax.block_until_ready(h0[et])
        jax.block_until_ready(h1o[et])
    print("KERNEL_OK")
</pallas_src>

<mosaic_0001>
module attributes {stable_mosaic.version = 11 : i64} {
  func.func @_xw_kernel(%arg0: i32, %arg1: i32, %arg2: memref<2xi32, #tpu.memory_space<smem>>, %arg3: memref<1x128x16xbf16, #tpu.memory_space<vmem>>, %arg4: memref<1x16x128xbf16, #tpu.memory_space<vmem>>, %arg5: memref<1x128x128xbf16, #tpu.memory_space<vmem>>) attributes {dimension_semantics = [#tpu.dimension_semantics<parallel>, #tpu.dimension_semantics<parallel>], iteration_bounds = array<i64: 2, 1>, scalar_prefetch = 1 : i64, scratch_operands = 0 : i64, tpu.core_type = #tpu.core_type<tc>, window_params = [{transform_indices = @transform_0, window_bounds = array<i64: 1, 128, 16>}, {transform_indices = @transform_1, window_bounds = array<i64: 1, 16, 128>}, {transform_indices = @transform_2, window_bounds = array<i64: 1, 128, 128>}]} {
    %c0 = arith.constant 0 : index
    %c0_0 = arith.constant 0 : index
    %c0_1 = arith.constant 0 : index
    %0 = vector.load %arg3[%c0, %c0_0, %c0_1] : memref<1x128x16xbf16, #tpu.memory_space<vmem>>, vector<1x128x16xbf16>
    %1 = vector.shape_cast %0 : vector<1x128x16xbf16> to vector<128x16xbf16>
    %c0_2 = arith.constant 0 : index
    %c0_3 = arith.constant 0 : index
    %c0_4 = arith.constant 0 : index
    %2 = vector.load %arg4[%c0_2, %c0_3, %c0_4] : memref<1x16x128xbf16, #tpu.memory_space<vmem>>, vector<1x16x128xbf16>
    %3 = vector.shape_cast %2 : vector<1x16x128xbf16> to vector<16x128xbf16>
    %cst = arith.constant dense<0.000000e+00> : vector<128x128xf32>
    %4 = tpu.matmul %1, %3, %cst {dimension_numbers = #tpu.dot_dimension_numbers<[1], [0], [0], [1], [0, 0, 1, 1], [], []>} : vector<128x16xbf16>, vector<16x128xbf16>, vector<128x128xf32> -> vector<128x128xf32>
    %5 = arith.truncf %4 : vector<128x128xf32> to vector<128x128xbf16>
    %c0_5 = arith.constant 0 : index
    %c0_6 = arith.constant 0 : index
    %c0_7 = arith.constant 0 : index
    %6 = vector.load %arg5[%c0_5, %c0_6, %c0_7] : memref<1x128x128xbf16, #tpu.memory_space<vmem>>, vector<1x128x128xbf16>
    %7 = vector.shape_cast %6 : vector<1x128x128xbf16> to vector<128x128xbf16>
    %8 = vector.shape_cast %5 : vector<128x128xbf16> to vector<1x128x128xbf16>
    tpu.vector_store %arg5[%c0_5, %c0_6, %c0_7], %8 {strides = array<i32>} : memref<1x128x128xbf16, #tpu.memory_space<vmem>>, vector<1x128x128xbf16>,
    return
  }
  func.func @transform_0(%arg0: i32, %arg1: i32, %arg2: memref<2xi32, #tpu.memory_space<smem>>) -> (i32, i32, i32) {
    %0 = arith.index_cast %arg0 : i32 to index
    %1 = memref.load %arg2[%0] : memref<2xi32, #tpu.memory_space<smem>>
    %c0_i32 = arith.constant 0 : i32
    %c0_i32_0 = arith.constant 0 : i32
    return %1, %arg1, %c0_i32 : i32, i32, i32
  }
  func.func @transform_1(%arg0: i32, %arg1: i32, %arg2: memref<2xi32, #tpu.memory_space<smem>>) -> (i32, i32, i32) {
    %c0_i32 = arith.constant 0 : i32
    %c0_i32_0 = arith.constant 0 : i32
    %c0_i32_1 = arith.constant 0 : i32
    return %arg0, %c0_i32, %c0_i32_0 : i32, i32, i32
  }
  func.func @transform_2(%arg0: i32, %arg1: i32, %arg2: memref<2xi32, #tpu.memory_space<smem>>) -> (i32, i32, i32) {
    %c0_i32 = arith.constant 0 : i32
    %c0_i32_0 = arith.constant 0 : i32
    return %arg0, %arg1, %c0_i32 : i32, i32, i32
  }
}

</mosaic_0001>

<llo_original>
// kernel: tpu_custom_call.1
$region0: #{tpu_custom_call.1}
  #allocation0 [shape = 'u32[]', space=smem, size = 0x4, offset = 0x4, fixed_abs, tag = 'smem constant byte address 0x4 - core index']
  #allocation1 [shape = 'u32[72,128]{1,0:T(1,128)}', space=vmem, size = 0x9000, scoped, tag = 'internal scratch']
  #allocation2 [shape = 's32[1]{0}', space=sflag, size = 0x4, scoped, tag = 'scoped memory for tpu_custom_call.1']
  #allocation3 [shape = 'u8[512]{0}', space=smem, size = 0x200, scoped, tag = 'prefetched SMEM operand 0']
  %s0 = inlined_call_operand.vmem [shape: s32[2], index: 0, kind: input, shape index: {}]
  %s1 = inlined_call_operand.vmem [shape: bf16[1,128,16], index: 1, kind: input, shape index: {}]
  %s2 = inlined_call_operand.vmem [shape: bf16[2,16,128], index: 2, kind: input, shape index: {}]
  %s3 = inlined_call_operand.hbm [shape: bf16[2,128,128], index: 3, kind: output, shape index: {}]
  %s4 = sld [smem:[#allocation0]]
  $region41: #{tpu_custom_call.1} parent=0
    _
  %s6 = ssub.s32 1, %s4
  %s7 = scalar_select 0, %s6, %s4
  %s9 = sshll.u32 %s0, 4
  %s10 = int_to_ptr.vmem [resolvable:$true] %s9
  %12 = dma.vmem_to_smem %s10, 16, [#allocation3], [#allocation2]
  %14 = dma.done [#allocation2], 16
  %15 = sfence
  $region1: #{tpu_custom_call.1} parent=0
    #allocation4 [shape = 'u8[65536]{0}', space=vmem, size = 0x10000, scoped, tag = 'output window, operand 0']
    #allocation5 [shape = 's32[2]{0}', space=sflag, size = 0x8, scoped, tag = 'scoped memory for tpu_custom_call.1']
    %16 = vsyncpa [#allocation5], 0
    %s17 = scalar_lea.sflag [#allocation5], 1
    %18 = vsyncpa %s17, 0
    loop: start=0, step=1, limit=4
    $region2: #{tpu_custom_call.1} parent=1 // loop_pre_header
      _
    $region3: #{tpu_custom_call.1} parent=1 // loop_header
      %s20 = sphi 0, %s24
      %p21 = scmp.ge.s32.totalorder %s20, 4
      %s27 = sphi 0, %s39
      %s28 = sphi 0, %s35
      %s29 = sphi 0, %s27
      %s30 = sphi 0, %s28
      %s31 = sphi 0, %s29
      %s32 = sphi 0, %s30
      %s46 = sphi 0, %s48
      %s49 = sphi 0, %s46
      %s50 = sphi 0, %s49
      %s66 = sphi 0, %s50
      %s72 = sphi 0, %s74
      %s75 = sphi 0, %s72
      %s76 = sphi 0, %s75
      %s92 = sphi 0, %s76
      %s100 = sphi 0, %s102
      %s103 = sphi 0, %s100
      %s104 = sphi 0, %s103
      %s120 = sphi 0, %s104
    $region4: #{tpu_custom_call.1} parent=1 // loop_header_branch
      %23 = sbr.rel (%p21) target = $region8
    $region5: #{tpu_custom_call.1} parent=1 // loop_body
      %s25 = ssub.s32 %s20, 1
      %s26 = ssub.s32 %s20, 2
      %s33 = sadd.s32 1, %s28
      %p34 = scmp.ge.s32.totalorder %s33, 1
      %s35 = scalar_select %p34, 0, %s33
      %s36 = sadd.s32 1, %s27
      %s37 = scalar_select %p34, %s36, %s27
      %p38 = scmp.ge.s32.totalorder %s37, 2
      %s39 = scalar_select %p38, 0, %s37
      %s40 = sld [smem:[#allocation3 + %s27]]
      %s41 = sld [smem:[#allocation3 + %s39]]
      %s42 = ssub.s32 %s40, %s41
      %s43 = ssub.s32 %s28, %s35
      %s44 = sor.u32 %s42, %s43
      %p45 = scmp.eq.s32.totalorder %s44, 0
      %s47 = sadd.s32 %s46, 1
      %s48 = scalar_select %p45, %s46, %s47
      %p51 = pneg %p45
      %p52 = scmp.eq.s32.totalorder %s20, 1
      %p53 = por %p51, %p52
      %p54 = scmp.ne.s32.totalorder %s46, %s49
      %p55 = scmp.eq.s32.totalorder %s20, 0
      %p56 = por %p54, %p55
      %p57 = scmp.ne.s32.totalorder %s46, %s49
      %p58 = scmp.eq.s32.totalorder %s25, 1
      %p59 = por %p57, %p58
      %p60 = scmp.ne.s32.totalorder %s49, %s50
      %p61 = scmp.eq.s32.totalorder %s25, 0
      %p62 = por %p60, %p61
      %p63 = scmp.ne.s32.totalorder %s49, %s50
      %p64 = scmp.eq.s32.totalorder %s26, 1
      %p65 = por %p63, %p64
      %p67 = scmp.ne.s32.totalorder %s50, %s66
      %p68 = scmp.eq.s32.totalorder %s26, 0
      %p69 = por %p67, %p68
      %s70 = ssub.s32 %s27, %s39
      %p71 = scmp.eq.s32.totalorder %s70, 0
      %s73 = sadd.s32 %s72, 1
      %s74 = scalar_select %p71, %s72, %s73
      %p77 = pneg %p71
      %p78 = scmp.eq.s32.totalorder %s20, 1
      %p79 = por %p77, %p78
      %p80 = scmp.ne.s32.totalorder %s72, %s75
      %p81 = scmp.eq.s32.totalorder %s20, 0
      %p82 = por %p80, %p81
      %p83 = scmp.ne.s32.totalorder %s72, %s75
      %p84 = scmp.eq.s32.totalorder %s25, 1
      %p85 = por %p83, %p84
      %p86 = scmp.ne.s32.totalorder %s75, %s76
      %p87 = scmp.eq.s32.totalorder %s25, 0
      %p88 = por %p86, %p87
      %p89 = scmp.ne.s32.totalorder %s75, %s76
      %p90 = scmp.eq.s32.totalorder %s26, 1
      %p91 = por %p89, %p90
      %p93 = scmp.ne.s32.totalorder %s76, %s92
      %p94 = scmp.eq.s32.totalorder %s26, 0
      %p95 = por %p93, %p94
      %s96 = ssub.s32 %s27, %s39
      %s97 = ssub.s32 %s28, %s35
      %s98 = sor.u32 %s96, %s97
      %p99 = scmp.eq.s32.totalorder %s98, 0
      %s101 = sadd.s32 %s100, 1
      %s102 = scalar_select %p99, %s100, %s101
      %p105 = pneg %p99
      %p106 = scmp.eq.s32.totalorder %s20, 1
      %p107 = por %p105, %p106
      %p108 = scmp.ne.s32.totalorder %s100, %s103
      %p109 = scmp.eq.s32.totalorder %s20, 0
      %p110 = por %p108, %p109
      %p111 = scmp.ne.s32.totalorder %s100, %s103
      %p112 = scmp.eq.s32.totalorder %s25, 1
      %p113 = por %p111, %p112
      %p114 = scmp.ne.s32.totalorder %s103, %s104
      %p115 = scmp.eq.s32.totalorder %s25, 0
      %p116 = por %p114, %p115
      %p117 = scmp.ne.s32.totalorder %s103, %s104
      %p118 = scmp.eq.s32.totalorder %s26, 1
      %p119 = por %p117, %p118
      %p121 = scmp.ne.s32.totalorder %s104, %s120
      %p122 = scmp.eq.s32.totalorder %s26, 0
      %p123 = por %p121, %p122
      %p124 = scmp.le.s32.totalorder 1, %s20
      %p125 = scmp.lt.s32.totalorder %s20, 3
      %p126 = pnand %p124, %p125
      %p127 = pneg %p126
      // Predicated region
      $region9: #{tpu_custom_call.1} parent=5 // pred_check
        _
      $region10: #{tpu_custom_call.1} parent=5 // pred_check_branch
        %129 = sbr.rel (%p126) target = $region12
      $region11: #{tpu_custom_call.1} parent=5 // pred_region
        %s130 = ssub.s32 %s20, 1
      $region12: #{tpu_custom_call.1} parent=5 // pred_fallthru
        _
      %p131 = scmp.lt.s32.totalorder %s20, 2
      // Predicated region
      $region13: #{tpu_custom_call.1} parent=5 // pred_check
        %p132 = pneg %p131
      $region14: #{tpu_custom_call.1} parent=5 // pred_check_branch
        %134 = sbr.rel (%p132) target = $region16
      $region15: #{tpu_custom_call.1} parent=5 // pred_region
        // Predicated region
        $region17: #{tpu_custom_call.1} parent=15 // pred_check
          %p135 = pneg %p56
        $region18: #{tpu_custom_call.1} parent=15 // pred_check_branch
          %137 = sbr.rel (%p135) target = $region20
        $region19: #{tpu_custom_call.1} parent=15 // pred_region
          %s138 = sld [smem:[#allocation3 + %s27]]
          %s139 = smul.u32 16, %s28
          %p140 = scmp.lt.s32.totalorder %s138, 0
          %s141 = scalar_select %p140, %s138, 0
          %p142 = scmp.lt.s32.totalorder %s139, 15
          %s143 = scalar_select %p142, %s139, 15
          %s144 = smul.addr %s141, 16
          %s145 = sadd.s32 %s143, %s144
          %s146 = smul.addr %s145, 4
          %s147 = scalar_lea.vmem %s1, %s146
          %s148 = sld [smem:[#allocation3 + %s27]]
          %s149 = smul.u32 16, %s28
        $region20: #{tpu_custom_call.1} parent=15 // pred_fallthru
          _
        // Predicated region
        $region21: #{tpu_custom_call.1} parent=15 // pred_check
          %p150 = pneg %p82
        $region22: #{tpu_custom_call.1} parent=15 // pred_check_branch
          %152 = sbr.rel (%p150) target = $region24
        $region23: #{tpu_custom_call.1} parent=15 // pred_region
          %p153 = scmp.lt.s32.totalorder %s27, 1
          %s154 = scalar_select %p153, %s27, 1
          %s155 = smul.addr %s154, 2
          %s156 = smul.addr %s155, 4
          %s157 = scalar_lea.vmem %s2, %s156
        $region24: #{tpu_custom_call.1} parent=15 // pred_fallthru
          _
      $region16: #{tpu_custom_call.1} parent=5 // pred_fallthru
        _
      %p158 = scmp.le.s32.totalorder 1, %s20
      %p159 = scmp.lt.s32.totalorder %s20, 3
      %p160 = pnand %p158, %p159
      %p161 = pneg %p160
      // Predicated region
      $region25: #{tpu_custom_call.1} parent=5 // pred_check
        _
      $region26: #{tpu_custom_call.1} parent=5 // pred_check_branch
        %163 = sbr.rel (%p160) target = $region28
      $region27: #{tpu_custom_call.1} parent=5 // pred_region
        %s164 = ssub.s32 %s20, 1
        %s165 = sld [smem:[#allocation3 + %s29]]
        %s166 = smul.u32 16, %s30
        %p167 = scmp.lt.s32.totalorder %s165, 0
        %s168 = scalar_select %p167, %s165, 0
        %p169 = scmp.lt.s32.totalorder %s166, 15
        %s170 = scalar_select %p169, %s166, 15
        %s171 = smul.addr %s168, 16
        %s172 = sadd.s32 %s170, %s171
        %s173 = smul.addr %s172, 4
        %s174 = scalar_lea.vmem %s1, %s173
        %p175 = pneg %p62
        %p176 = pneg %p59
        %p177 = scmp.lt.s32.totalorder %s29, 1
        %s178 = scalar_select %p177, %s29, 1
        %s179 = smul.addr %s178, 2
        %s180 = smul.addr %s179, 4
        %s181 = scalar_lea.vmem %s2, %s180
        %p182 = pneg %p88
        %p183 = pneg %p85
        %p184 = pneg %p116
        %p185 = pneg %p113
        %s186 = sand.u32 %s103, 1
        %s187 = scalar_lea.sflag [#allocation5], %s186
        %s188 = sand.u32 %s103, 1
        %s189 = smul.addr %s188, 64
        %s190 = scalar_lea.vmem [#allocation4], %s189
        %s191 = sld [smem:[#allocation3 + %s29]]
        %s192 = smul.u32 16, %s30
        %p193 = scmp.lt.s32.totalorder %s191, 0
        %s194 = scalar_select %p193, %s191, 0
        %p195 = scmp.lt.s32.totalorder %s192, 15
        %s196 = scalar_select %p195, %s192, 15
        %s197 = smul.addr %s194, 16
        %s198 = sadd.s32 %s196, %s197
        %s199 = smul.addr %s198, 4
        %s200 = scalar_lea.vmem %s1, %s199
        %s201 = sld [smem:[#allocation3 + %s29]]
        %s202 = smul.u32 16, %s30
        %p203 = scmp.lt.s32.totalorder %s29, 1
        %s204 = scalar_select %p203, %s29, 1
        %s205 = smul.addr %s204, 2
        %s206 = smul.addr %s205, 4
        %s207 = scalar_lea.vmem %s2, %s206
        %s208 = smul.u32 16, %s30
        %v210 = vld [vmem:[%s200] sm:$0xf]
        %v211 = vld [vmem:[%s200 + $0x4] sm:$0xf]
        %v212 = vld [vmem:[%s200 + $0x8] sm:$0xf]
        %v213 = vld [vmem:[%s200 + $0xc] sm:$0xf]
        %v214 = vld [vmem:[%s200 + $0x10] sm:$0xf]
        %v215 = vld [vmem:[%s200 + $0x14] sm:$0xf]
        %v216 = vld [vmem:[%s200 + $0x18] sm:$0xf]
        %v217 = vld [vmem:[%s200 + $0x1c] sm:$0xf]
        %v218 = vld [vmem:[%s200 + $0x20] sm:$0xf]
        %v219 = vld [vmem:[%s200 + $0x24] sm:$0xf]
        %v220 = vld [vmem:[%s200 + $0x28] sm:$0xf]
        %v221 = vld [vmem:[%s200 + $0x2c] sm:$0xf]
        %v222 = vld [vmem:[%s200 + $0x30] sm:$0xf]
        %v223 = vld [vmem:[%s200 + $0x34] sm:$0xf]
        %v224 = vld [vmem:[%s200 + $0x38] sm:$0xf]
        %v225 = vld [vmem:[%s200 + $0x3c] sm:$0xf]
        %v226 = vld [vmem:[%s207] sm:$0xf]
        %v227 = vld [vmem:[%s207 + $0x4] sm:$0xf]
        %v244 = vunpack.c.l.b16 %v210
        %v245 = vunpack.c.l.b16 %v211
        %v246 = vunpack.c.l.b16 %v212
        %v247 = vunpack.c.l.b16 %v213
        %v248 = vunpack.c.l.b16 %v214
        %v249 = vunpack.c.l.b16 %v215
        %v250 = vunpack.c.l.b16 %v216
        %v251 = vunpack.c.l.b16 %v217
        %v252 = vunpack.c.l.b16 %v218
        %v253 = vunpack.c.l.b16 %v219
        %v254 = vunpack.c.l.b16 %v220
        %v255 = vunpack.c.l.b16 %v221
        %v256 = vunpack.c.l.b16 %v222
        %v257 = vunpack.c.l.b16 %v223
        %v258 = vunpack.c.l.b16 %v224
        %v259 = vunpack.c.l.b16 %v225
        %v260 = vpack.c.b16 %v245, %v244
        %v261 = vpack.c.b16 %v247, %v246
        %v262 = vpack.c.b16 %v249, %v248
        %v263 = vpack.c.b16 %v251, %v250
        %v264 = vpack.c.b16 %v253, %v252
        %v265 = vpack.c.b16 %v255, %v254
        %v266 = vpack.c.b16 %v257, %v256
        %v267 = vpack.c.b16 %v259, %v258
        %v270 = vunpack.c.l.b16 %v226
        %v271 = vunpack.c.l.b16 %v227
        %v272 = vpack.c.b16 %v271, %v270
        %vm274 = vcmask 130048
        %v276 = vsel %vm274, %v260, 0
        %v279 = vsel %vm274, %v261, 0
        %v282 = vsel %vm274, %v262, 0
        %v285 = vsel %vm274, %v263, 0
        %v288 = vsel %vm274, %v264, 0
        %v291 = vsel %vm274, %v265, 0
        %v294 = vsel %vm274, %v266, 0
        %v297 = vsel %vm274, %v267, 0
        %299 = vmatpush.bf16.msra.mxu0 0
        %300 = vmatpush.bf16.msra.mxu0 0
        %301 = vmatpush.bf16.msra.mxu0 0
        %302 = vmatpush.bf16.msra.mxu0 0
        %303 = vmatpush.bf16.msra.mxu0 0
        %304 = vmatpush.bf16.msra.mxu0 0
        %305 = vmatpush.bf16.msra.mxu0 0
        %306 = vmatpush.bf16.msra.mxu0 %v272
        %307 = vmatmul.bf16.gmra.mxu0 %v276
        %v308 = vpop.f32.mrf.mxu0
        %v309 = vadd.f32 0.0, %v308
        %v310 = vpop.f32.mrf.mxu0
        %v311 = vadd.f32 0.0, %v310
        %312 = vmatmul.bf16.gmra.mxu0 %v279
        %v313 = vpop.f32.mrf.mxu0
        %v314 = vadd.f32 0.0, %v313
        %v315 = vpop.f32.mrf.mxu0
        %v316 = vadd.f32 0.0, %v315
        %317 = vmatmul.bf16.gmra.mxu0 %v282
        %v318 = vpop.f32.mrf.mxu0
        %v319 = vadd.f32 0.0, %v318
        %v320 = vpop.f32.mrf.mxu0
        %v321 = vadd.f32 0.0, %v320
        %322 = vmatmul.bf16.gmra.mxu0 %v285
        %v323 = vpop.f32.mrf.mxu0
        %v324 = vadd.f32 0.0, %v323
        %v325 = vpop.f32.mrf.mxu0
        %v326 = vadd.f32 0.0, %v325
        %327 = vmatmul.bf16.gmra.mxu0 %v288
        %v328 = vpop.f32.mrf.mxu0
        %v329 = vadd.f32 0.0, %v328
        %v330 = vpop.f32.mrf.mxu0
        %v331 = vadd.f32 0.0, %v330
        %332 = vmatmul.bf16.gmra.mxu0 %v291
        %v333 = vpop.f32.mrf.mxu0
        %v334 = vadd.f32 0.0, %v333
        %v335 = vpop.f32.mrf.mxu0
        %v336 = vadd.f32 0.0, %v335
        %337 = vmatmul.bf16.gmra.mxu0 %v294
        %v338 = vpop.f32.mrf.mxu0
        %v339 = vadd.f32 0.0, %v338
        %v340 = vpop.f32.mrf.mxu0
        %v341 = vadd.f32 0.0, %v340
        %342 = vmatmul.bf16.gmra.mxu0 %v297
        %v343 = vpop.f32.mrf.mxu0
        %v344 = vadd.f32 0.0, %v343
        %v345 = vpop.f32.mrf.mxu0
        %v346 = vadd.f32 0.0, %v345
        %347 = vdwg.mxu0
        %v348 = vpack.c.bf16 %v309, %v309
        %v349 = vpack.c.bf16 %v311, %v311
        %v350 = vpack.c.bf16 %v314, %v314
        %v351 = vpack.c.bf16 %v316, %v316
        %v352 = vpack.c.bf16 %v319, %v319
        %v353 = vpack.c.bf16 %v321, %v321
        %v354 = vpack.c.bf16 %v324, %v324
        %v355 = vpack.c.bf16 %v326, %v326
        %v356 = vpack.c.bf16 %v329, %v329
        %v357 = vpack.c.bf16 %v331, %v331
        %v358 = vpack.c.bf16 %v334, %v334
        %v359 = vpack.c.bf16 %v336, %v336
        %v360 = vpack.c.bf16 %v339, %v339
        %v361 = vpack.c.bf16 %v341, %v341
        %v362 = vpack.c.bf16 %v344, %v344
        %v363 = vpack.c.bf16 %v346, %v346
        %364 = vst [vmem:[%s190] sm:$0xf] %v348
        %365 = vst [vmem:[%s190 + $0x4] sm:$0xf] %v349
        %366 = vst [vmem:[%s190 + $0x8] sm:$0xf] %v350
        %367 = vst [vmem:[%s190 + $0xc] sm:$0xf] %v351
        %368 = vst [vmem:[%s190 + $0x10] sm:$0xf] %v352
        %369 = vst [vmem:[%s190 + $0x14] sm:$0xf] %v353
        %370 = vst [vmem:[%s190 + $0x18] sm:$0xf] %v354
        %371 = vst [vmem:[%s190 + $0x1c] sm:$0xf] %v355
        %372 = vst [vmem:[%s190 + $0x20] sm:$0xf] %v356
        %373 = vst [vmem:[%s190 + $0x24] sm:$0xf] %v357
        %374 = vst [vmem:[%s190 + $0x28] sm:$0xf] %v358
        %375 = vst [vmem:[%s190 + $0x2c] sm:$0xf] %v359
        %376 = vst [vmem:[%s190 + $0x30] sm:$0xf] %v360
        %377 = vst [vmem:[%s190 + $0x34] sm:$0xf] %v361
        %378 = vst [vmem:[%s190 + $0x38] sm:$0xf] %v362
        %379 = vst [vmem:[%s190 + $0x3c] sm:$0xf] %v363
        %s380 = sand.u32 %s103, 1
        %s381 = scalar_lea.sflag [#allocation5], %s380
        %s382 = sand.u32 %s103, 1
        %s383 = smul.addr %s382, 64
        %s384 = scalar_lea.vmem [#allocation4], %s383
        // Predicated region
        $region29: #{tpu_custom_call.1} parent=27 // pred_check
          %p385 = pneg %p113
        $region30: #{tpu_custom_call.1} parent=27 // pred_check_branch
          %387 = sbr.rel (%p385) target = $region32
        $region31: #{tpu_custom_call.1} parent=27 // pred_region
          %s388 = smul.u32 16, %s30
          %390 = vsyncadd %s381, 0
          %s391 = smul.addr %s29, 16
          %s392 = sadd.s32 %s388, %s391
          %s393 = smul.addr %s392, 4
          %s394 = scalar_lea.hbm %s3, %s393
          %s395 = sshll.u32 %s384, 4
          %s396 = int_to_ptr.vmem [resolvable:$true] %s395
          %s397 = sshll.u32 %s394, 4
          %s398 = int_to_ptr.hbm [resolvable:$true] %s397
          %403 = dma.vmem_to_hbm [thread:$0]  %s396, 1024, %s398, %s381, 64, 64, 4
        $region32: #{tpu_custom_call.1} parent=27 // pred_fallthru
          _
      $region28: #{tpu_custom_call.1} parent=5 // pred_fallthru
        _
      %p404 = scmp.le.s32.totalorder 2, %s20
      // Predicated region
      $region33: #{tpu_custom_call.1} parent=5 // pred_check
        %p405 = pneg %p404
      $region34: #{tpu_custom_call.1} parent=5 // pred_check_branch
        %407 = sbr.rel (%p405) target = $region36
      $region35: #{tpu_custom_call.1} parent=5 // pred_region
        %s408 = ssub.s32 %s20, 2
        // Predicated region
        $region37: #{tpu_custom_call.1} parent=35 // pred_check
          %p409 = pneg %p119
        $region38: #{tpu_custom_call.1} parent=35 // pred_check_branch
          %411 = sbr.rel (%p409) target = $region40
        $region39: #{tpu_custom_call.1} parent=35 // pred_region
          %s412 = sand.u32 %s104, 1
          %s413 = scalar_lea.sflag [#allocation5], %s412
          %s414 = sand.u32 %s104, 1
          %s415 = smul.addr %s414, 64
          %s416 = scalar_lea.vmem [#allocation4], %s415
          %418 = dma.done %s413, 1024
        $region40: #{tpu_custom_call.1} parent=35 // pred_fallthru
          _
      $region36: #{tpu_custom_call.1} parent=5 // pred_fallthru
        _
    $region6: #{tpu_custom_call.1} parent=1 // loop_footer
      %s24 = sadd.s32 1, %s20
    $region7: #{tpu_custom_call.1} parent=1 // loop_footer_branch
      %19 = sbr.rel target = $region3
    $region8: #{tpu_custom_call.1} parent=1 // loop_exit
      _
    %419 = vsyncpa [#allocation5], 1
    %s420 = scalar_lea.sflag [#allocation5], 1
    %421 = vsyncpa %s420, 1

</llo_original>
